<compile_context>
chip_gen: v6e
topology: v6e:2x2x1
jax: 0.10.0
libtpu: 0.0.40
codegen_flags: <defaults>
</compile_context>

<pallas_src>
import jax
import jax.numpy as jnp
from jax.experimental import pallas as pl
from jax.experimental.pallas import tpu as pltpu

_LANES = 128
# For x >= ~13, tanh(softplus(x)) == 1.0 in f32.  With cap = 30:
#   e = exp(30) ~ 1.07e13, num = e*(e+2) ~ 1.14e26  -> finite, (num+2) rounds
#   to num, so t == 1.0 exactly (divide path) and 1/(num+2) ~ 8.7e-27 is a
#   normal f32 (approx-rcp path never hits subnormals).  Hence x * t == x for
#   all clamped inputs and no final select is needed.
_X_CAP = 30.0


def _mish_kernel(x_ref, o_ref):
    x = x_ref[...].astype(jnp.float32)
    # tanh(log(1+e)) = ((1+e)^2 - 1) / ((1+e)^2 + 1) = (e^2 + 2e) / (e^2 + 2e + 2)
    e = jnp.exp(jnp.minimum(x, _X_CAP))
    num = e * (e + 2.0)
    if jnp.dtype(o_ref.dtype) == jnp.bfloat16:
        # Approx rcp: 1 EUP op + 1 mul instead of rcp + Newton refinement in
        # the VALU; ~2^-12 rel err vanishes in the bf16 round.
        t = num * pl.reciprocal(num + 2.0, approx=True)
    else:
        t = num / (num + 2.0)
    o_ref[...] = (x * t).astype(o_ref.dtype)


def _tpu_params():
    """Per-generation tile budget / scoped-VMEM limit (safe fallbacks)."""
    vmem_bytes = 128 << 20
    try:
        info = pltpu.get_tpu_info()
        vmem_bytes = int(getattr(info, "vmem_capacity_bytes", vmem_bytes))
    except Exception:
        pass
    if vmem_bytes <= (64 << 20):
        # v7x-class: 64 MiB VMEM per TensorCore, 2 TCs per chip.
        return {
            "target_tile": 4 << 20,
            "max_tile": 6 << 20,
            "vmem_limit": 48 << 20,
            "min_grid": 2,
        }
    # v5e / v6e class: 128 MiB VMEM, single TensorCore.
    return {
        "target_tile": 8 << 20,
        "max_tile": 8 << 20,
        "vmem_limit": 64 << 20,
        "min_grid": 1,
    }


def _mish_2d(x2d, block_rows=None):
    rows, lanes = x2d.shape
    itemsize = jnp.dtype(x2d.dtype).itemsize
    p = _tpu_params()

    if block_rows is None:
        block_rows = p["target_tile"] // (lanes * itemsize)

    # Row tile: multiple of 32 so packed sub-32-bit dtypes (bf16/int8) keep
    # unmasked vector stores; capped by the per-generation tile byte budget.
    tr = max(32, (int(block_rows) // 32) * 32)
    tr_cap = max(32, ((p["max_tile"] // (lanes * itemsize)) // 32) * 32)
    tr = min(tr, tr_cap)

    # On multi-TC parts (v7x) make sure mid/large tensors emit >= 2 grid steps
    # so the "parallel" axis actually shards the stream across both cores.
    if p["min_grid"] > 1 and rows * lanes * itemsize > (512 << 10) and rows >= 64:
        tr = min(tr, max(32, ((rows + 1) // 2 // 32) * 32))

    if rows <= tr:
        # Single block covering the whole array (block == array dims, so no
        # (8,128) divisibility requirement even for small/odd shapes).
        grid = (1,)
        block = (rows, lanes)
    else:
        # Fixed large tile; a partial last block is handled by Pallas masking.
        grid = (pl.cdiv(rows, tr),)
        block = (tr, lanes)

    return pl.pallas_call(
        _mish_kernel,
        out_shape=jax.ShapeDtypeStruct((rows, lanes), x2d.dtype),
        grid_spec=pltpu.PrefetchScalarGridSpec(
            num_scalar_prefetch=0,
            grid=grid,
            in_specs=[pl.BlockSpec(block, lambda i: (i, 0))],
            out_specs=pl.BlockSpec(block, lambda i: (i, 0)),
        ),
        compiler_params=pltpu.CompilerParams(
            # "parallel" lets v7x shard the grid across both TensorCores.
            dimension_semantics=("parallel",),
            vmem_limit_bytes=p["vmem_limit"],
        ),
    )(x2d)


def mish(x, *, block_rows=None):
    """Applies Mish elementwise. Accepts any shape; returns same shape/dtype."""
    orig_shape = x.shape
    n = x.size
    if n == 0:
        return x

    if n % _LANES == 0:
        # Aligned fast path: no padding concatenate, no post-slice copy.
        rows = n // _LANES
        out2d = _mish_2d(x.reshape(rows, _LANES), block_rows)
        return out2d.reshape(orig_shape)

    # Ragged fallback (rare): run the lane-aligned prefix through the fast
    # streaming kernel and only the <128-element tail through a tiny
    # single-block kernel (instead of pad + slice over the whole tensor).
    x_flat = jnp.ravel(x)
    n_main = (n // _LANES) * _LANES
    tail_out = _mish_2d(x_flat[n_main:].reshape(1, n - n_main)).reshape(-1)
    if n_main == 0:
        return tail_out.reshape(orig_shape)
    main_out = _mish_2d(
        x_flat[:n_main].reshape(n_main // _LANES, _LANES), block_rows
    ).reshape(-1)
    # TODO(synk): fuse the tail into the main kernel via a masked store on the
    # last row to drop the remaining concatenate copy.
    return jnp.concatenate([main_out, tail_out]).reshape(orig_shape)


def mish_reference(x):
    xf = x.astype(jnp.float32)
    return (xf * jnp.tanh(jax.nn.softplus(xf))).astype(x.dtype)


if __name__ == "__main__":
    key = jax.random.PRNGKey(0)
    # Small NCHW-like activation tensor (batch=2, channels=4, spatial=16x16).
    x = jax.random.normal(key, (2, 4, 16, 16), dtype=jnp.float32) * 3.0

    y = mish(x)
    jax.block_until_ready(y)

    y_ref = mish_reference(x)
    assert y.shape == x.shape and y.dtype == x.dtype
    assert jnp.allclose(y, y_ref, atol=1e-5, rtol=1e-5), "mismatch vs reference (aligned f32)"

    # Saturation region (exercise the x > cap clamp; must be exactly x).
    x_big = jnp.array([[25.0, 30.0, 35.0, 100.0] * 32], dtype=jnp.float32)
    y_big = mish(x_big)
    jax.block_until_ready(y_big)
    assert jnp.allclose(y_big, mish_reference(x_big), atol=1e-5, rtol=1e-5), "mismatch (saturation)"

    # bf16 path (approx-reciprocal branch), looser tolerance.
    xb = (jax.random.normal(jax.random.PRNGKey(2), (2, 4, 16, 16)) * 3.0).astype(jnp.bfloat16)
    yb = mish(xb)
    jax.block_until_ready(yb)
    assert jnp.allclose(yb.astype(jnp.float32), mish_reference(xb).astype(jnp.float32),
                        atol=2e-2, rtol=2e-2), "mismatch (bf16 path)"

    # Ragged (non lane-aligned) fallback: tail-only and prefix+tail cases.
    x2 = jax.random.normal(jax.random.PRNGKey(1), (3, 5, 7), dtype=jnp.float32) * 3.0
    y2 = mish(x2)
    jax.block_until_ready(y2)
    assert jnp.allclose(y2, mish_reference(x2), atol=1e-5, rtol=1e-5), "mismatch (ragged tail)"

    x3 = jax.random.normal(jax.random.PRNGKey(3), (3, 50), dtype=jnp.float32) * 3.0
    y3 = mish(x3)
    jax.block_until_ready(y3)
    assert jnp.allclose(y3, mish_reference(x3), atol=1e-5, rtol=1e-5), "mismatch (ragged prefix+tail)"

    print("KERNEL_OK")
</pallas_src>

<mosaic_0001>
module attributes {stable_mosaic.version = 11 : i64} {
  func.func @_mish_kernel(%arg0: i32, %arg1: memref<16x128xf32, #tpu.memory_space<vmem>>, %arg2: memref<16x128xf32, #tpu.memory_space<vmem>>) attributes {dimension_semantics = [#tpu.dimension_semantics<parallel>], iteration_bounds = array<i64: 1>, scalar_prefetch = 0 : i64, scratch_operands = 0 : i64, tpu.core_type = #tpu.core_type<tc>, window_params = [{transform_indices = @transform_0, window_bounds = array<i64: 16, 128>}, {transform_indices = @transform_1, window_bounds = array<i64: 16, 128>}]} {
    %c0 = arith.constant 0 : index
    %c0_0 = arith.constant 0 : index
    %0 = vector.load %arg1[%c0, %c0_0] : memref<16x128xf32, #tpu.memory_space<vmem>>, vector<16x128xf32>
    %cst = arith.constant 3.000000e+01 : f32
    %1 = vector.broadcast %cst : f32 to vector<16x128xf32>
    %2 = arith.minimumf %0, %1 : vector<16x128xf32>
    %3 = math.exp %2 : vector<16x128xf32>
    %cst_1 = arith.constant 2.000000e+00 : f32
    %4 = vector.broadcast %cst_1 : f32 to vector<16x128xf32>
    %5 = arith.addf %3, %4 : vector<16x128xf32>
    %6 = arith.mulf %3, %5 : vector<16x128xf32>
    %cst_2 = arith.constant 2.000000e+00 : f32
    %7 = vector.broadcast %cst_2 : f32 to vector<16x128xf32>
    %8 = arith.addf %6, %7 : vector<16x128xf32>
    %9 = arith.divf %6, %8 : vector<16x128xf32>
    %10 = arith.mulf %0, %9 : vector<16x128xf32>
    %c0_3 = arith.constant 0 : index
    %c0_4 = arith.constant 0 : index
    %11 = vector.load %arg2[%c0_3, %c0_4] : memref<16x128xf32, #tpu.memory_space<vmem>>, vector<16x128xf32>
    tpu.vector_store %arg2[%c0_3, %c0_4], %10 {strides = array<i32>} : memref<16x128xf32, #tpu.memory_space<vmem>>, vector<16x128xf32>,
    return
  }
  func.func @transform_0(%arg0: i32) -> (i32, i32) {
    %c0_i32 = arith.constant 0 : i32
    %c0_i32_0 = arith.constant 0 : i32
    return %arg0, %c0_i32 : i32, i32
  }
  func.func @transform_1(%arg0: i32) -> (i32, i32) {
    %c0_i32 = arith.constant 0 : i32
    %c0_i32_0 = arith.constant 0 : i32
    return %arg0, %c0_i32 : i32, i32
  }
}

</mosaic_0001>

<llo_original>
// kernel: tpu_custom_call.1
$region0: #{tpu_custom_call.1}
  #allocation0 [shape = 'u32[]', space=smem, size = 0x4, offset = 0x4, fixed_abs, tag = 'smem constant byte address 0x4 - core index']
  #allocation1 [shape = 'u32[144,128]{1,0:T(1,128)}', space=vmem, size = 0x12000, scoped, tag = 'internal scratch']
  %s0 = inlined_call_operand.hbm [shape: f32[16,128], index: 0, kind: input, shape index: {}]
  %s1 = inlined_call_operand.hbm [shape: f32[16,128], index: 1, kind: output, shape index: {}]
  %s2 = sld [smem:[#allocation0]]
  $region18: #{tpu_custom_call.1} parent=0
    _
  %s4 = ssub.s32 1, %s2
  %s5 = scalar_select 0, %s4, %s2
  $region1: #{tpu_custom_call.1} parent=0
    #allocation2 [shape = 'u8[8192]{0}', space=vmem, size = 0x2000, scoped, tag = 'input window, operand 0, single buffered']
    #allocation3 [shape = 's32[1]{0}', space=sflag, size = 0x4, scoped, tag = 'scoped memory for tpu_custom_call.1']
    #allocation4 [shape = 's32[1]{0}', space=sflag, size = 0x4, scoped, tag = 'scoped memory for tpu_custom_call.1']
    #allocation5 [shape = 'u8[8192]{0}', space=vmem, size = 0x2000, scoped, tag = 'output window, operand 0, single buffered']
    %6 = vsyncpa [#allocation3], 0
    %7 = vsyncpa [#allocation4], 0
    // Predicated region
    $region2: #{tpu_custom_call.1} parent=1 // pred_check
      _
    $region3: #{tpu_custom_call.1} parent=1 // pred_check_branch
      %9 = sbr.rel (0) target = $region5
    $region4: #{tpu_custom_call.1} parent=1 // pred_region
      %s11 = ssub.s32 256, 256
      %12 = vsyncadd [#allocation3], %s11
      %s13 = sshll.u32 [#allocation2], 4
      %s14 = int_to_ptr.vmem [resolvable:$true] %s13
      %19 = dma.hbm_to_vmem [thread:$0]  %s0, 256, %s14, [#allocation3], 128, 128, 8
    $region5: #{tpu_custom_call.1} parent=1 // pred_fallthru
      _
    // Predicated region
    $region6: #{tpu_custom_call.1} parent=1 // pred_check
      _
    $region7: #{tpu_custom_call.1} parent=1 // pred_check_branch
      %21 = sbr.rel (0) target = $region9
    $region8: #{tpu_custom_call.1} parent=1 // pred_region
      %22 = dma.done [#allocation3], 256
    $region9: #{tpu_custom_call.1} parent=1 // pred_fallthru
      _
    %v23 = vld [vmem:[#allocation2] sm:$0xff]
    %v24 = vld [vmem:[#allocation2 + $0x8] sm:$0xff]
    %v25 = vmin.f32 %v23, 30.0
    %v26 = vmin.f32 %v24, 30.0
    %v27 = vmul.f32 %v25, 1.442695
    %v28 = vpow.pop %v27
    %v29 = vmul.f32 %v26, 1.442695
    %v30 = vpow.pop %v29
    %v31 = vadd.f32 %v28, 2.0
    %v32 = vadd.f32 %v30, 2.0
    %v33 = vmul.f32 %v28, %v31
    %v34 = vmul.f32 %v30, %v32
    %v35 = vadd.f32 %v33, 2.0
    %v36 = vadd.f32 %v34, 2.0
    %v37 = vrcp.pop %v35
    %v38 = vmul.f32 %v33, %v37
    %v39 = vrcp.pop %v36
    %v40 = vmul.f32 %v34, %v39
    %v41 = vmul.f32 %v23, %v38
    %v42 = vmul.f32 %v24, %v40
    %43 = vst [vmem:[#allocation5] sm:$0xff] %v41
    %44 = vst [vmem:[#allocation5 + $0x8] sm:$0xff] %v42
    // Predicated region
    $region10: #{tpu_custom_call.1} parent=1 // pred_check
      _
    $region11: #{tpu_custom_call.1} parent=1 // pred_check_branch
      %46 = sbr.rel (0) target = $region13
    $region12: #{tpu_custom_call.1} parent=1 // pred_region
      %s48 = ssub.s32 256, 256
      %49 = vsyncadd [#allocation4], %s48
      %s50 = sshll.u32 [#allocation5], 4
      %s51 = int_to_ptr.vmem [resolvable:$true] %s50
      %56 = dma.vmem_to_hbm [thread:$0]  %s51, 256, %s1, [#allocation4], 128, 128, 8
    $region13: #{tpu_custom_call.1} parent=1 // pred_fallthru
      _
    // Predicated region
    $region14: #{tpu_custom_call.1} parent=1 // pred_check
      _
    $region15: #{tpu_custom_call.1} parent=1 // pred_check_branch
      %58 = sbr.rel (0) target = $region17
    $region16: #{tpu_custom_call.1} parent=1 // pred_region
      %59 = dma.done [#allocation4], 256
    $region17: #{tpu_custom_call.1} parent=1 // pred_fallthru
      _
    %60 = vsyncpa [#allocation3], 1
    %61 = vsyncpa [#allocation4], 1

</llo_original>
